<compile_context>
chip_gen: v5e
topology: v5e:2x2
jax: 0.10.0
libtpu: 0.0.40
codegen_flags: <defaults>
</compile_context>

<pallas_src>
import functools
import math

import jax
import jax.numpy as jnp
from jax.experimental import pallas as pl
from jax.experimental.pallas import tpu as pltpu

EPS = 1e-6
NEG_INF = -1e30   # finite mask value; safe because KV tile 0 is always processed


# ----------------------------- small helpers ---------------------------------


def _pick_tile(n, pref, align):
    """Largest tile <= pref that is a multiple of `align` and divides n; else full n."""
    if n <= pref:
        return n
    for t in range(pref, align - 1, -align):
        if n % t == 0:
            return t
    return n


def _round_up(n, m):
    return (n + m - 1) // m * m


def _vmem_limit(*byte_counts):
    """Double-buffered block footprint + slack, clamped (fits v7x 64 MiB)."""
    need = 2 * sum(byte_counts) + (2 << 20)
    return int(min(max(need, 8 << 20), 96 << 20))


def _cparams(semantics, vmem_bytes):
    return pltpu.CompilerParams(dimension_semantics=semantics,
                                vmem_limit_bytes=vmem_bytes)


# ----------------------------- kernels ---------------------------------------


def _rms_stats_kernel(x_ref, o_ref):
    """Per-row inverse RMS of x (stats in f32)."""
    x = x_ref[...].astype(jnp.float32)
    ms = jnp.mean(x * x, axis=-1, keepdims=True)
    o_ref[...] = jax.lax.rsqrt(ms + EPS)


def _qkv_kernel(x_ref, inv_ref, nw_ref, wq_ref, wk_ref, wv_ref,
                bq_ref, bk_ref, bv_ref, q_ref, k_ref, v_ref,
                accq, acck, accv, *, nk, q_scale):
    """Fused RMSNorm + Q/K/V projection; outputs written head-major (B,H,T,hd)."""
    kk = pl.program_id(2)

    @pl.when(kk == 0)
    def _():
        accq[...] = jnp.zeros_like(accq)
        acck[...] = jnp.zeros_like(acck)
        accv[...] = jnp.zeros_like(accv)

    # Apply the fused norm on the x tile, then feed the MXU in bf16.
    xn = (x_ref[...].astype(jnp.float32) * inv_ref[...] * nw_ref[...]
          ).astype(jnp.bfloat16)
    accq[...] += jnp.dot(xn, wq_ref[...], preferred_element_type=jnp.float32)
    acck[...] += jnp.dot(xn, wk_ref[...], preferred_element_type=jnp.float32)
    accv[...] += jnp.dot(xn, wv_ref[...], preferred_element_type=jnp.float32)

    @pl.when(kk == nk - 1)
    def _():
        # 1/sqrt(hd) folded into q here: the epilogue already touches the tile.
        q_ref[...] = ((accq[...] + bq_ref[...]) * q_scale).astype(q_ref.dtype)
        k_ref[...] = (acck[...] + bk_ref[...]).astype(k_ref.dtype)
        v_ref[...] = (accv[...] + bv_ref[...]).astype(v_ref.dtype)


def _flash_kernel(q_ref, k_ref, v_ref, o_ref, m_sc, l_sc, acc_sc,
                  *, tq, tkv, nk):
    """Head-batched causal flash attention (online softmax). q is pre-scaled."""
    qi = pl.program_id(1)
    ki = pl.program_id(2)

    @pl.when(ki == 0)
    def _():
        m_sc[...] = jnp.full_like(m_sc, -jnp.inf)
        l_sc[...] = jnp.zeros_like(l_sc)
        acc_sc[...] = jnp.zeros_like(acc_sc)

    def process(apply_mask):
        q = q_ref[...]                     # (H, tq, hd)  bf16 (already * 1/sqrt(hd))
        k = k_ref[...]                     # (H, tkv, hd) bf16
        v = v_ref[...]                     # (H, tkv, hd) bf16
        s = jax.lax.dot_general(           # (H, tq, tkv) f32 on the MXU
            q, k, dimension_numbers=(((2,), (2,)), ((0,), (0,))),
            preferred_element_type=jnp.float32)
        if apply_mask:
            row = qi * tq + jax.lax.broadcasted_iota(jnp.int32, (tq, tkv), 0)
            col = ki * tkv + jax.lax.broadcasted_iota(jnp.int32, (tq, tkv), 1)
            s = jnp.where((row >= col)[None, :, :], s, NEG_INF)
        m_new = jnp.maximum(m_sc[...], s.max(-1, keepdims=True))
        alpha = jnp.exp(m_sc[...] - m_new)
        p = jnp.exp(s - m_new)
        l_sc[...] = alpha * l_sc[...] + p.sum(-1, keepdims=True)
        acc_sc[...] = alpha * acc_sc[...] + jax.lax.dot_general(
            p.astype(v.dtype), v,
            dimension_numbers=(((2,), (1,)), ((0,), (0,))),
            preferred_element_type=jnp.float32)
        m_sc[...] = m_new

    # Fully-below-diagonal KV tile: no mask needed (saves the iota/where VPU work).
    @pl.when(ki * tkv + tkv - 1 <= qi * tq)
    def _():
        process(False)

    # Diagonal-straddling KV tile: apply the causal mask.
    # Fully-future tiles satisfy neither condition -> no compute; their
    # index_map is clamped in the wrapper, so no DMA is issued either.
    @pl.when((ki * tkv <= qi * tq + tq - 1) & (ki * tkv + tkv - 1 > qi * tq))
    def _():
        process(True)

    @pl.when(ki == nk - 1)
    def _():
        # Invariant: KV tile 0 is always processed and always contains column 0,
        # so every row has seen at least one unmasked score (finite m, l > 0)
        # before finalization -> the finite NEG_INF masking is safe.
        inv_l = pl.reciprocal(l_sc[...], approx=True)   # EUP, off the VPU path
        o_ref[...] = (acc_sc[...] * inv_l).astype(o_ref.dtype)


def _oproj_kernel(a_ref, w_ref, b_ref, r_ref, o_ref, acc_ref, *, nk):
    """Output projection reading head-major attention output; K-steps over heads.
    Residual add fused in the epilogue."""
    kk = pl.program_id(2)

    @pl.when(kk == 0)
    def _():
        acc_ref[...] = jnp.zeros_like(acc_ref)

    acc_ref[...] += jnp.dot(a_ref[...], w_ref[...],
                            preferred_element_type=jnp.float32)

    @pl.when(kk == nk - 1)
    def _():
        y = acc_ref[...] + b_ref[...] + r_ref[...].astype(jnp.float32)
        o_ref[...] = y.astype(o_ref.dtype)


def _ffn_kernel(x_ref, inv_ref, nw_ref, wg_ref, wu_ref, bg_ref, bu_ref, o_ref,
                accg, accu, *, nk):
    """Fused RMSNorm + gated FFN: o = silu(xn @ Wg + bg) * (xn @ Wu + bu)."""
    kk = pl.program_id(2)

    @pl.when(kk == 0)
    def _():
        accg[...] = jnp.zeros_like(accg)
        accu[...] = jnp.zeros_like(accu)

    xn = (x_ref[...].astype(jnp.float32) * inv_ref[...] * nw_ref[...]
          ).astype(jnp.bfloat16)
    accg[...] += jnp.dot(xn, wg_ref[...], preferred_element_type=jnp.float32)
    accu[...] += jnp.dot(xn, wu_ref[...], preferred_element_type=jnp.float32)

    @pl.when(kk == nk - 1)
    def _():
        g = accg[...] + bg_ref[...]
        u = accu[...] + bu_ref[...]
        o_ref[...] = (jax.nn.silu(g) * u).astype(o_ref.dtype)


def _matmul_kernel(x_ref, w_ref, b_ref, *rest, nk, fuse_residual):
    """Generic tiled (M,N,K) matmul: o = x @ w + b (+ residual)."""
    if fuse_residual:
        r_ref, o_ref, acc_ref = rest
    else:
        o_ref, acc_ref = rest
    kk = pl.program_id(2)

    @pl.when(kk == 0)
    def _():
        acc_ref[...] = jnp.zeros_like(acc_ref)

    x = x_ref[...]
    if x.dtype != jnp.bfloat16:
        x = x.astype(jnp.bfloat16)
    acc_ref[...] += jnp.dot(x, w_ref[...], preferred_element_type=jnp.float32)

    @pl.when(kk == nk - 1)
    def _():
        y = acc_ref[...] + b_ref[...].astype(jnp.float32)
        if fuse_residual:
            y = y + r_ref[...].astype(jnp.float32)
        o_ref[...] = y.astype(o_ref.dtype)


# ----------------------------- wrappers ---------------------------------------


def rms_stats(x, *, tm_pref=512):
    M, D = x.shape
    tm = _pick_tile(M, tm_pref, 8)
    vmem = _vmem_limit(tm * D * x.dtype.itemsize, tm * 128 * 4)
    return pl.pallas_call(
        _rms_stats_kernel,
        out_shape=jax.ShapeDtypeStruct((M, 1), jnp.float32),
        grid=(M // tm,),
        in_specs=[pl.BlockSpec((tm, D), lambda i: (i, 0))],
        out_specs=pl.BlockSpec((tm, 1), lambda i: (i, 0)),
        compiler_params=_cparams(("parallel",), vmem),
    )(x)


def qkv_proj(x, inv, norm_w, wq, wk, wv, bq, bk, bv, *, B, T, num_heads,
             tm_pref=512, tk_pref=512):
    """Fused norm + QKV; outputs (B, H, T, hd) bf16, q pre-scaled by 1/sqrt(hd)."""
    M, D = x.shape
    hd = D // num_heads
    tm = _pick_tile(T, tm_pref, 8)          # row tiles never straddle batches
    tk = _pick_tile(D, tk_pref, 128)
    tpb = T // tm
    nm, nk = B * tpb, D // tk
    kernel = functools.partial(_qkv_kernel, nk=nk, q_scale=1.0 / math.sqrt(hd))

    w_spec = pl.BlockSpec((tk, hd), lambda i, j, k: (k, j))
    b_spec = pl.BlockSpec((1, hd), lambda i, j, k: (0, j))
    out_spec = pl.BlockSpec((None, None, tm, hd),
                            lambda i, j, k: (i // tpb, j, i % tpb, 0))
    out_sds = jax.ShapeDtypeStruct((B, num_heads, T, hd), jnp.bfloat16)
    vmem = _vmem_limit(tm * tk * 2, tm * 128 * 4, tk * 4,
                       3 * tk * hd * 2, 3 * 128 * 4,
                       3 * tm * hd * 2, 3 * tm * hd * 4)
    return pl.pallas_call(
        kernel,
        out_shape=(out_sds, out_sds, out_sds),
        grid=(nm, num_heads, nk),
        in_specs=[
            pl.BlockSpec((tm, tk), lambda i, j, k: (i, k)),   # x (bf16 residual)
            pl.BlockSpec((tm, 1), lambda i, j, k: (i, 0)),    # inv_rms
            pl.BlockSpec((1, tk), lambda i, j, k: (0, k)),    # norm weight
            w_spec, w_spec, w_spec, b_spec, b_spec, b_spec,
        ],
        out_specs=(out_spec, out_spec, out_spec),
        scratch_shapes=[pltpu.VMEM((tm, hd), jnp.float32)] * 3,
        compiler_params=_cparams(("parallel", "parallel", "arbitrary"), vmem),
    )(x, inv, norm_w, wq, wk, wv, bq, bk, bv)


def flash_attention(q, k, v, *, tq_pref=128, tkv_pref=128):
    B, H, T, hd = q.shape
    tq = _pick_tile(T, tq_pref, 8)
    tkv = _pick_tile(T, tkv_pref, 8)
    nq, nk = T // tq, T // tkv
    kernel = functools.partial(_flash_kernel, tq=tq, tkv=tkv, nk=nk)

    def kv_map(b, qi, ki):
        # Clamp to the last causally-needed KV tile: skipped (fully-future)
        # steps map to an already-resident block, so no DMA is issued.
        return (b, 0, jnp.minimum(ki, (qi * tq + tq - 1) // tkv), 0)

    vmem = _vmem_limit(H * tq * hd * 2, 2 * H * tkv * hd * 2, H * tq * hd * 2,
                       2 * H * tq * 128 * 4, H * tq * hd * 4)
    return pl.pallas_call(
        kernel,
        out_shape=jax.ShapeDtypeStruct((B, H, T, hd), jnp.bfloat16),
        grid=(B, nq, nk),
        in_specs=[
            pl.BlockSpec((None, H, tq, hd), lambda b, qi, ki: (b, 0, qi, 0)),
            pl.BlockSpec((None, H, tkv, hd), kv_map),
            pl.BlockSpec((None, H, tkv, hd), kv_map),
        ],
        out_specs=pl.BlockSpec((None, H, tq, hd), lambda b, qi, ki: (b, 0, qi, 0)),
        scratch_shapes=[pltpu.VMEM((H, tq, 1), jnp.float32),
                        pltpu.VMEM((H, tq, 1), jnp.float32),
                        pltpu.VMEM((H, tq, hd), jnp.float32)],
        compiler_params=_cparams(("parallel", "parallel", "arbitrary"), vmem),
    )(q, k, v)


def o_proj(attn, w, b, residual, *, B, T, tm_pref=512, tn_pref=512):
    """h = attn @ W_o + b_o + residual, reading attn head-major (K axis = heads)."""
    _, H, _, hd = attn.shape
    M, D = residual.shape
    tm = _pick_tile(T, tm_pref, 8)
    tn = _pick_tile(D, tn_pref, 128)
    tpb = T // tm
    nm, nn = B * tpb, D // tn
    kernel = functools.partial(_oproj_kernel, nk=H)
    vmem = _vmem_limit(tm * hd * 2, hd * tn * 2, tn * 4, tm * tn * 2,
                       tm * tn * 2, tm * tn * 4)
    return pl.pallas_call(
        kernel,
        out_shape=jax.ShapeDtypeStruct((M, D), jnp.bfloat16),
        grid=(nm, nn, H),
        in_specs=[
            pl.BlockSpec((None, None, tm, hd),
                         lambda i, j, k: (i // tpb, k, i % tpb, 0)),   # attn
            pl.BlockSpec((hd, tn), lambda i, j, k: (k, j)),            # W_o
            pl.BlockSpec((1, tn), lambda i, j, k: (0, j)),             # b_o
            pl.BlockSpec((tm, tn), lambda i, j, k: (i, j)),            # residual
        ],
        out_specs=pl.BlockSpec((tm, tn), lambda i, j, k: (i, j)),
        scratch_shapes=[pltpu.VMEM((tm, tn), jnp.float32)],
        compiler_params=_cparams(("parallel", "parallel", "arbitrary"), vmem),
    )(attn, w, b, residual)


def gated_ffn(x, inv, norm_w, wg, wu, bg, bu,
              *, tm_pref=512, tn_pref=512, tk_pref=512):
    M, D = x.shape
    _, Hf = wg.shape
    tm = _pick_tile(M, tm_pref, 8)
    tn = _pick_tile(Hf, tn_pref, 128)
    tk = _pick_tile(D, tk_pref, 128)
    nk = D // tk
    kernel = functools.partial(_ffn_kernel, nk=nk)
    vmem = _vmem_limit(tm * tk * 2, tm * 128 * 4, tk * 4,
                       2 * tk * tn * 2, 2 * tn * 4, tm * tn * 2,
                       2 * tm * tn * 4)
    return pl.pallas_call(
        kernel,
        out_shape=jax.ShapeDtypeStruct((M, Hf), jnp.bfloat16),
        grid=(M // tm, Hf // tn, nk),
        in_specs=[
            pl.BlockSpec((tm, tk), lambda i, j, k: (i, k)),
            pl.BlockSpec((tm, 1), lambda i, j, k: (i, 0)),
            pl.BlockSpec((1, tk), lambda i, j, k: (0, k)),
            pl.BlockSpec((tk, tn), lambda i, j, k: (k, j)),
            pl.BlockSpec((tk, tn), lambda i, j, k: (k, j)),
            pl.BlockSpec((1, tn), lambda i, j, k: (0, j)),
            pl.BlockSpec((1, tn), lambda i, j, k: (0, j)),
        ],
        out_specs=pl.BlockSpec((tm, tn), lambda i, j, k: (i, j)),
        scratch_shapes=[pltpu.VMEM((tm, tn), jnp.float32),
                        pltpu.VMEM((tm, tn), jnp.float32)],
        compiler_params=_cparams(("parallel", "parallel", "arbitrary"), vmem),
    )(x, inv, norm_w, wg, wu, bg, bu)


def matmul(x, w, b, residual=None, *, out_dtype=jnp.bfloat16,
           tm_pref=512, tn_pref=512, tk_pref=512):
    """Generic tiled GEMM with fused bias / residual.  Pads M/N/K to tile
    multiples (zero padding is exact) so awkward vocab sizes never produce
    a single huge block."""
    M, K = x.shape
    _, N = w.shape
    tm = min(tm_pref, _round_up(M, 8))
    tn = min(tn_pref, _round_up(N, 128))
    tk = min(tk_pref, _round_up(K, 128))
    Mp, Np, Kp = _round_up(M, tm), _round_up(N, tn), _round_up(K, tk)
    if (Mp, Kp) != (M, K):
        x = jnp.pad(x, ((0, Mp - M), (0, Kp - K)))
    if (Kp, Np) != (K, N):
        w = jnp.pad(w, ((0, Kp - K), (0, Np - N)))
    if Np != N:
        b = jnp.pad(b, ((0, 0), (0, Np - N)))
    if residual is not None and (Mp, Np) != (M, N):
        residual = jnp.pad(residual, ((0, Mp - M), (0, Np - N)))

    nk = Kp // tk
    kernel = functools.partial(_matmul_kernel, nk=nk,
                               fuse_residual=residual is not None)
    in_specs = [
        pl.BlockSpec((tm, tk), lambda i, j, k: (i, k)),
        pl.BlockSpec((tk, tn), lambda i, j, k: (k, j)),
        pl.BlockSpec((1, tn), lambda i, j, k: (0, j)),
    ]
    args = [x, w, b]
    if residual is not None:
        in_specs.append(pl.BlockSpec((tm, tn), lambda i, j, k: (i, j)))
        args.append(residual)
    vmem = _vmem_limit(tm * tk * x.dtype.itemsize, tk * tn * w.dtype.itemsize,
                       tn * 4, tm * tn * 2, tm * tn * 4, tm * tn * 4)
    out = pl.pallas_call(
        kernel,
        out_shape=jax.ShapeDtypeStruct((Mp, Np), out_dtype),
        grid=(Mp // tm, Np // tn, nk),
        in_specs=in_specs,
        out_specs=pl.BlockSpec((tm, tn), lambda i, j, k: (i, j)),
        scratch_shapes=[pltpu.VMEM((tm, tn), jnp.float32)],
        compiler_params=_cparams(("parallel", "parallel", "arbitrary"), vmem),
    )(*args)
    if (Mp, Np) != (M, N):
        out = out[:M, :N]
    return out


# ----------------------------- model ------------------------------------------


def dense_block(x2d, p, num_heads, B, T):
    """One DenseBlock on a flattened (B*T, D) bf16 residual stream.
    Reference wiring: h = x + attn(attn_norm(x)); out = h + ffn(ffn_norm(x)).
    Both norms act on x, so they share the same inv-rms row statistics."""
    inv = rms_stats(x2d)                                        # (M, 1) f32
    q, k, v = qkv_proj(x2d, inv, p["attn_norm_w"],
                       p["w_q"], p["w_k"], p["w_v"],
                       p["b_q"], p["b_k"], p["b_v"],
                       B=B, T=T, num_heads=num_heads)           # (B,H,T,hd) bf16
    attn = flash_attention(q, k, v)                             # (B,H,T,hd) bf16
    h = o_proj(attn, p["w_o"], p["b_o"], x2d, B=B, T=T)         # (M, D) bf16
    act = gated_ffn(x2d, inv, p["ffn_norm_w"],
                    p["w_gate"], p["w_up"], p["b_gate"], p["b_up"])  # (M, 4D) bf16
    out = matmul(act, p["w_down"], p["b_down"], residual=h,
                 out_dtype=jnp.bfloat16)                        # (M, D) bf16
    return out


def dense_gpt_forward(tokens, params, num_heads):
    B, T = tokens.shape
    # Embedding lookups are gathers -> plain XLA glue.
    x = params["embed"][tokens] + params["pos"][:T][None, :, :]   # (B, T, D) f32
    D = x.shape[-1]
    x2d = x.reshape(B * T, D).astype(jnp.bfloat16)
    for bp in params["blocks"]:
        x2d = dense_block(x2d, bp, num_heads, B, T)
    logits = matmul(x2d, params["w_out"], params["b_out"], out_dtype=jnp.float32)
    return logits.reshape(B, T, -1)


# ----------------------------- parameter init --------------------------------


def xavier_uniform(key, shape, dtype=jnp.bfloat16):
    fan_in, fan_out = shape
    bound = math.sqrt(6.0 / (fan_in + fan_out))
    return jax.random.uniform(key, shape, jnp.float32, -bound, bound).astype(dtype)


def init_params(key, vocab_size, cntx, dim, num_layers):
    hidden = 4 * dim
    keys = iter(jax.random.split(key, 4 + 8 * num_layers))
    params = {
        "embed": xavier_uniform(next(keys), (vocab_size, dim), jnp.float32),
        "pos": xavier_uniform(next(keys), (cntx, dim), jnp.float32),
        "w_out": xavier_uniform(next(keys), (dim, vocab_size)),       # bf16
        "b_out": jnp.zeros((1, vocab_size), jnp.float32),
        "blocks": [],
    }
    for _ in range(num_layers):
        params["blocks"].append({
            "attn_norm_w": jnp.ones((1, dim), jnp.float32),
            "w_q": xavier_uniform(next(keys), (dim, dim)),
            "w_k": xavier_uniform(next(keys), (dim, dim)),
            "w_v": xavier_uniform(next(keys), (dim, dim)),
            "b_q": jnp.zeros((1, dim), jnp.float32),
            "b_k": jnp.zeros((1, dim), jnp.float32),
            "b_v": jnp.zeros((1, dim), jnp.float32),
            "w_o": xavier_uniform(next(keys), (dim, dim)),
            "b_o": jnp.zeros((1, dim), jnp.float32),
            "ffn_norm_w": jnp.ones((1, dim), jnp.float32),
            "w_gate": xavier_uniform(next(keys), (dim, hidden)),
            "w_up": xavier_uniform(next(keys), (dim, hidden)),
            "b_gate": jnp.zeros((1, hidden), jnp.float32),
            "b_up": jnp.zeros((1, hidden), jnp.float32),
            "w_down": xavier_uniform(next(keys), (hidden, dim)),
            "b_down": jnp.zeros((1, dim), jnp.float32),
        })
    return params


# ----------------------------- main ------------------------------------------

if __name__ == "__main__":
    VOCAB, BATCH, CNTX, DIM, HEADS, LAYERS = 64, 2, 8, 32, 4, 2

    key = jax.random.PRNGKey(0)
    pkey, tkey = jax.random.split(key)
    params = init_params(pkey, VOCAB, CNTX, DIM, LAYERS)
    tokens = jax.random.randint(tkey, (BATCH, CNTX), 0, VOCAB, dtype=jnp.int32)

    logits = dense_gpt_forward(tokens, params, HEADS)
    logits = jax.block_until_ready(logits)
    assert logits.shape == (BATCH, CNTX, VOCAB)
    assert bool(jnp.all(jnp.isfinite(logits)))
    print("KERNEL_OK")
</pallas_src>

<mosaic_0001>
module attributes {stable_mosaic.version = 11 : i64} {
  func.func @_rms_stats_kernel(%arg0: i32, %arg1: memref<16x32xbf16, #tpu.memory_space<vmem>>, %arg2: memref<16x1xf32, #tpu.memory_space<vmem>>) attributes {dimension_semantics = [#tpu.dimension_semantics<parallel>], iteration_bounds = array<i64: 1>, scalar_prefetch = 0 : i64, scratch_operands = 0 : i64, tpu.core_type = #tpu.core_type<tc>, window_params = [{transform_indices = @transform_0, window_bounds = array<i64: 16, 32>}, {transform_indices = @transform_1, window_bounds = array<i64: 16, 1>}]} {
    %c0 = arith.constant 0 : index
    %c0_0 = arith.constant 0 : index
    %0 = vector.load %arg1[%c0, %c0_0] : memref<16x32xbf16, #tpu.memory_space<vmem>>, vector<16x32xbf16>
    %1 = arith.extf %0 : vector<16x32xbf16> to vector<16x32xf32>
    %2 = arith.mulf %1, %1 : vector<16x32xf32>
    %cst = arith.constant dense<0.000000e+00> : vector<16xf32>
    %3 = vector.multi_reduction <add>, %2, %cst [1] : vector<16x32xf32> to vector<16xf32>
    %4 = vector.shape_cast %3 : vector<16xf32> to vector<16x1xf32>
    %cst_1 = arith.constant 3.200000e+01 : f32
    %5 = vector.broadcast %cst_1 : f32 to vector<16x1xf32>
    %6 = arith.divf %4, %5 : vector<16x1xf32>
    %cst_2 = arith.constant 9.99999997E-7 : f32
    %7 = vector.broadcast %cst_2 : f32 to vector<16x1xf32>
    %8 = arith.addf %6, %7 : vector<16x1xf32>
    %9 = math.rsqrt %8 : vector<16x1xf32>
    %c0_3 = arith.constant 0 : index
    %c0_4 = arith.constant 0 : index
    %10 = vector.load %arg2[%c0_3, %c0_4] : memref<16x1xf32, #tpu.memory_space<vmem>>, vector<16x1xf32>
    tpu.vector_store %arg2[%c0_3, %c0_4], %9 {strides = array<i32>} : memref<16x1xf32, #tpu.memory_space<vmem>>, vector<16x1xf32>,
    return
  }
  func.func @transform_0(%arg0: i32) -> (i32, i32) {
    %c0_i32 = arith.constant 0 : i32
    %c0_i32_0 = arith.constant 0 : i32
    return %arg0, %c0_i32 : i32, i32
  }
  func.func @transform_1(%arg0: i32) -> (i32, i32) {
    %c0_i32 = arith.constant 0 : i32
    %c0_i32_0 = arith.constant 0 : i32
    return %arg0, %c0_i32 : i32, i32
  }
}

</mosaic_0001>

<llo_original>
// kernel: tpu_custom_call.1
$region0: #{tpu_custom_call.1}
  #allocation0 [shape = 'u32[]', space=smem, size = 0x4, offset = 0x4, fixed_abs, tag = 'smem constant byte address 0x4 - core index']
  #allocation1 [shape = 'u32[72,128]{1,0:T(1,128)}', space=vmem, size = 0x9000, scoped, tag = 'internal scratch']
  %s0 = inlined_call_operand.hbm [shape: bf16[16,32], index: 0, kind: input, shape index: {}]
  %s1 = inlined_call_operand.vmem [shape: f32[16,1], index: 1, kind: output, shape index: {}]
  %s2 = sld [smem:[#allocation0]]
  $region18: #{tpu_custom_call.1} parent=0
    _
  %s4 = ssub.s32 1, %s2
  %s5 = scalar_select 0, %s4, %s2
  $region1: #{tpu_custom_call.1} parent=0
    #allocation2 [shape = 'u8[4096]{0}', space=vmem, size = 0x1000, scoped, tag = 'input window, operand 0, single buffered']
    #allocation3 [shape = 's32[1]{0}', space=sflag, size = 0x4, scoped, tag = 'scoped memory for tpu_custom_call.1']
    %6 = vsyncpa [#allocation3], 0
    // Predicated region
    $region2: #{tpu_custom_call.1} parent=1 // pred_check
      _
    $region3: #{tpu_custom_call.1} parent=1 // pred_check_branch
      %8 = sbr.rel (0) target = $region5
    $region4: #{tpu_custom_call.1} parent=1 // pred_region
      %10 = vsyncadd [#allocation3], 0
      %s11 = sshll.u32 %s0, 4
      %s12 = int_to_ptr.hbm [resolvable:$true] %s11
      %s13 = sshll.u32 [#allocation2], 4
      %s14 = int_to_ptr.vmem [resolvable:$true] %s13
      %19 = dma.hbm_to_vmem [thread:$0]  %s12, 128, %s14, [#allocation3], 64, 64, 4
    $region5: #{tpu_custom_call.1} parent=1 // pred_fallthru
      _
    // Predicated region
    $region6: #{tpu_custom_call.1} parent=1 // pred_check
      _
    $region7: #{tpu_custom_call.1} parent=1 // pred_check_branch
      %21 = sbr.rel (0) target = $region9
    $region8: #{tpu_custom_call.1} parent=1 // pred_region
      %23 = dma.done [#allocation3], 128
    $region9: #{tpu_custom_call.1} parent=1 // pred_fallthru
      _
    %v24 = vld [vmem:[#allocation2] sm:$0xf]
    %v25 = vld [vmem:[#allocation2 + $0x4] sm:$0xf]
    %v26 = vunpack.c.l.bf16 %v24
    %v27 = vunpack.c.l.bf16 %v25
    %v28 = vmul.f32 %v26, %v26
    %v29 = vmul.f32 %v27, %v27
    %vm30 = vcmask 261120
    %v31 = vsel %vm30, %v28, 0.0
    %32 = vadd.xlane.f32.xlu0 %v31
    %v33 = vpop.xlane.xlu0 %32
    %v34 = vsel %vm30, %v29, 0.0
    %35 = vadd.xlane.f32.xlu0 %v34
    %v36 = vpop.xlane.xlu0 %35
    %v37 = vrcp.pop 32.0
    %v38 = vmul.f32 32.0, %v37
    %v39 = vsub.f32 1.0, %v38
    %v40 = vmul.f32 %v37, %v39
    %v41 = vadd.f32 %v37, %v40
    %vm42 = vweird.f32 %v37
    %v43 = vsel %vm42, %v37, %v41
    %v44 = vmul.f32 %v33, %v43
    %v45 = vmul.f32 %v36, %v43
    %v46 = vadd.f32 %v44, 1e-06
    %v47 = vadd.f32 %v45, 1e-06
    %v48 = vrsqrt.pop %v46
    %v49 = vmul.f32 %v48, %v46
    %v50 = vmul.f32 %v49, %v48
    %v51 = vmul.f32 0.5, %v50
    %v52 = vsub.f32 1.5, %v51
    %v53 = vmul.f32 %v48, %v52
    %vm54 = vweird.f32 %v46
    %vm55 = vweird.f32 %v48
    %vm56 = vmor %vm54, %vm55
    %v57 = vsel %vm56, %v48, %v53
    %v58 = vrsqrt.pop %v47
    %v59 = vmul.f32 %v58, %v47
    %v60 = vmul.f32 %v59, %v58
    %v61 = vmul.f32 0.5, %v60
    %v62 = vsub.f32 1.5, %v61
    %v63 = vmul.f32 %v58, %v62
    %vm64 = vweird.f32 %v47
    %vm65 = vweird.f32 %v58
    %vm66 = vmor %vm64, %vm65
    %v67 = vsel %vm66, %v58, %v63
    %vm68 = vcmask 7168
    %69 = vst.msk [vmem:[%s1] sm:$0xff] %vm68, %v57
    %70 = vst.msk [vmem:[%s1 + $0x8] sm:$0xff] %vm68, %v67
    // Predicated region
    $region10: #{tpu_custom_call.1} parent=1 // pred_check
      _
    $region11: #{tpu_custom_call.1} parent=1 // pred_check_branch
      %72 = sbr.rel (0) target = $region13
    $region12: #{tpu_custom_call.1} parent=1 // pred_region
      _
    $region13: #{tpu_custom_call.1} parent=1 // pred_fallthru
      _
    // Predicated region
    $region14: #{tpu_custom_call.1} parent=1 // pred_check
      _
    $region15: #{tpu_custom_call.1} parent=1 // pred_check_branch
      %74 = sbr.rel (0) target = $region17
    $region16: #{tpu_custom_call.1} parent=1 // pred_region
      _
    $region17: #{tpu_custom_call.1} parent=1 // pred_fallthru
      _
    %75 = vsyncpa [#allocation3], 1

</llo_original>
